<compile_context>
chip_gen: v7x
topology: tpu7x:2x2x1
jax: 0.10.0
libtpu: 0.0.40
codegen_flags: <defaults>
</compile_context>

<pallas_src>
import functools
import math

import jax
import jax.numpy as jnp
from jax.experimental import pallas as pl
from jax.experimental.pallas import tpu as pltpu

_TAPS = tuple((dy, dx) for dy in (-1, 0, 1) for dx in (-1, 0, 1))


def _fused_dimred_kernel(x_ref, m_ref, a1_ref, b1_ref, a2_ref, b2_ref, o_ref,
                         patches_ref, *, W, cin_pad, cout_pad):
    """Fused (ConvBR -> ConvBR) on one lane-axis block.

    x_ref      : (cin_pad, L)            input; lanes = (batch, H, W) flattened
    m_ref      : (9, L)                  per-tap boundary masks (period H*W)
    a1_ref     : (cout_pad, 9*cin_pad)   layer-1 im2col weights (BN scale folded)
    b1_ref     : (cout_pad, 1)           layer-1 folded BN bias
    a2_ref     : (cout_pad, 9*cout_pad)  layer-2 im2col weights (BN scale folded)
    b2_ref     : (cout_pad, 1)           layer-2 folded BN bias
    o_ref      : (cout_pad, L)           output (lane-dense)
    patches_ref: (9*max(cin_pad,cout_pad), L)  VMEM scratch for the im2col matrix
    """
    L = x_ref.shape[-1]

    def conv_bn_relu(xin, a, bias, cpad):
        # Build the (9*cpad, L) im2col matrix with XLU lane-rolls + border
        # masks, writing each (cpad, L) tap slab at a sublane-aligned offset
        # (cpad is a multiple of 8), then ONE MXU matmul.  BN scale is already
        # folded into `a`, so the epilogue is just +bias and ReLU in f32.
        for t_idx, (dy, dx) in enumerate(_TAPS):
            s = dy * W + dx                       # shift on the flat lane axis
            t = xin if s == 0 else pltpu.roll(xin, (-s) % L, axis=1)
            if (dy, dx) != (0, 0):
                # Zero out-of-image taps (also kills batch-boundary wraps).
                # Note: 0 * Inf/NaN would propagate; inputs here are finite.
                t = t * m_ref[t_idx:t_idx + 1, :]
            patches_ref[pl.ds(t_idx * cpad, cpad), :] = t
        patches = patches_ref[pl.ds(0, 9 * cpad), :]
        acc = jnp.dot(a, patches, preferred_element_type=jnp.float32)
        return jnp.maximum(acc + bias, 0.0)

    x = x_ref[...].astype(jnp.float32)                           # (cin_pad, L)
    h = conv_bn_relu(x, a1_ref[...], b1_ref[...], cin_pad)       # stays on-chip
    y = conv_bn_relu(h, a2_ref[...], b2_ref[...], cout_pad)      # (cout_pad, L)
    o_ref[...] = y.astype(o_ref.dtype)


def _round_up(v, m):
    return (v + m - 1) // m * m


def _fold_weights(w_oihw, scale, cin_pad, cout_pad):
    """(O,I,3,3) conv weight + per-channel BN scale -> (cout_pad, 9*cin_pad)."""
    O, I, KH, KW = w_oihw.shape
    w = jnp.pad(w_oihw, ((0, cout_pad - O), (0, cin_pad - I), (0, 0), (0, 0)))
    a = jnp.transpose(w, (0, 2, 3, 1)).reshape(cout_pad, KH * KW * cin_pad)
    s = jnp.pad(scale, (0, cout_pad - O))
    return (a * s[:, None]).astype(jnp.float32)


def _boundary_masks(H, W, chunk):
    """(9, chunk) f32 masks; tap (dy,dx) valid iff 0<=y+dy<H and 0<=x+dx<W."""
    pos = jnp.arange(chunk, dtype=jnp.int32) % (H * W)
    row, col = pos // W, pos % W
    rows = []
    for dy, dx in _TAPS:
        ok = jnp.ones((chunk,), jnp.bool_)
        if dy == -1:
            ok = ok & (row >= 1)
        elif dy == 1:
            ok = ok & (row <= H - 2)
        if dx == -1:
            ok = ok & (col >= 1)
        elif dx == 1:
            ok = ok & (col <= W - 2)
        rows.append(ok)
    return jnp.stack(rows, axis=0).astype(jnp.float32)


def _num_lane_blocks(N, HW):
    """2 parallel lane-axis blocks on 2-TC chips (v7x), else 1 (v5e/v6e)."""
    try:
        kind = jax.devices()[0].device_kind.lower()
    except Exception:
        kind = ""
    n_tc = 2 if "v7" in kind else 1
    if n_tc > 1 and N % n_tc == 0 and ((N // n_tc) * HW) % 128 == 0:
        return n_tc
    return 1


@jax.jit
def dimensional_reduction(x_nchw, w1, s1, b1, w2, s2, b2):
    """Forward of DimensionalReduction: (N, Cin, H, W) -> (N, Cout, H, W)."""
    N, Cin, H, W = x_nchw.shape
    Cout = w1.shape[0]
    HW = H * W
    Ltot = N * HW
    cin_pad = _round_up(Cin, 8)
    cout_pad = _round_up(Cout, 8)

    # Lane-dense, sublane-aligned layout: channels on sublanes (padded to 8),
    # (batch, H, W) flattened on lanes.  Tiny host-side layout ops only.
    x_f = jnp.transpose(x_nchw, (1, 0, 2, 3)).reshape(Cin, Ltot)
    x_f = jnp.pad(x_f, ((0, cin_pad - Cin), (0, 0))).astype(jnp.float32)

    a1 = _fold_weights(w1, s1, cin_pad, cout_pad)      # (cout_pad, 9*cin_pad)
    a2 = _fold_weights(w2, s2, cout_pad, cout_pad)     # (cout_pad, 9*cout_pad)
    bb1 = jnp.pad(b1, (0, cout_pad - Cout)).reshape(cout_pad, 1).astype(jnp.float32)
    bb2 = jnp.pad(b2, (0, cout_pad - Cout)).reshape(cout_pad, 1).astype(jnp.float32)

    G = _num_lane_blocks(N, HW)
    chunk = Ltot // G
    masks = _boundary_masks(H, W, chunk)               # identical for every block

    kernel = functools.partial(_fused_dimred_kernel, W=W,
                               cin_pad=cin_pad, cout_pad=cout_pad)
    out_f = pl.pallas_call(
        kernel,
        out_shape=jax.ShapeDtypeStruct((cout_pad, Ltot), x_nchw.dtype),
        grid_spec=pltpu.PrefetchScalarGridSpec(
            num_scalar_prefetch=0,
            grid=(G,),                                  # 2 parallel blocks on v7x
            in_specs=[
                pl.BlockSpec((cin_pad, chunk), lambda g: (0, g)),
                pl.BlockSpec((9, chunk), lambda g: (0, 0)),            # resident
                pl.BlockSpec((cout_pad, 9 * cin_pad), lambda g: (0, 0)),
                pl.BlockSpec((cout_pad, 1), lambda g: (0, 0)),
                pl.BlockSpec((cout_pad, 9 * cout_pad), lambda g: (0, 0)),
                pl.BlockSpec((cout_pad, 1), lambda g: (0, 0)),
            ],
            out_specs=pl.BlockSpec((cout_pad, chunk), lambda g: (0, g)),
            scratch_shapes=[
                pltpu.VMEM((9 * max(cin_pad, cout_pad), chunk), jnp.float32)],
        ),
        compiler_params=pltpu.CompilerParams(
            dimension_semantics=("parallel",)),
    )(x_f, masks, a1, bb1, a2, bb2)

    out = out_f[:Cout].reshape(Cout, N, H, W)
    return jnp.transpose(out, (1, 0, 2, 3))


def _kaiming_normal(key, shape_oihw, a=1.0):
    """nn.init.kaiming_normal_(w, a=1) for Conv2d weight (O, I, kH, kW)."""
    o, i, kh, kw = shape_oihw
    fan_in = i * kh * kw
    std = math.sqrt(2.0 / ((1.0 + a * a) * fan_in))
    return std * jax.random.normal(key, shape_oihw, dtype=jnp.float32)


def make_params(key, in_channel, out_channel, eps=1e-5):
    """Deterministic parameters for DimensionalReduction(in_channel, out_channel)."""
    k1, k2 = jax.random.split(key)
    w1 = _kaiming_normal(k1, (out_channel, in_channel, 3, 3))    # OIHW
    w2 = _kaiming_normal(k2, (out_channel, out_channel, 3, 3))   # OIHW
    # BN init (inference): gamma=1, beta=0, running_mean=0, running_var=1 -> fold.
    scale = jnp.full((out_channel,), 1.0 / math.sqrt(1.0 + eps), jnp.float32)
    bias = jnp.zeros((out_channel,), jnp.float32)
    return (w1, scale, bias), (w2, scale, bias)


def _reference(x_nchw, w1, s1, b1, w2, s2, b2):
    """Plain-JAX reference (lax.conv, f32-precise) for sanity checking."""
    def block(x, w, s, b):
        y = jax.lax.conv_general_dilated(
            x, w, window_strides=(1, 1), padding=((1, 1), (1, 1)),
            dimension_numbers=("NCHW", "OIHW", "NCHW"),
            precision=jax.lax.Precision.HIGHEST)
        y = y * s[None, :, None, None] + b[None, :, None, None]
        return jnp.maximum(y, 0.0)
    return block(block(x_nchw, w1, s1, b1), w2, s2, b2)


if __name__ == "__main__":
    key = jax.random.PRNGKey(0)
    kx, kp = jax.random.split(key)

    in_channel, out_channel = 4, 8
    N, H, W = 2, 16, 16
    x = jax.random.normal(kx, (N, in_channel, H, W), dtype=jnp.float32)

    (w1, s1, b1), (w2, s2, b2) = make_params(kp, in_channel, out_channel)

    out = dimensional_reduction(x, w1, s1, b1, w2, s2, b2)
    out = jax.block_until_ready(out)

    ref = _reference(x, w1, s1, b1, w2, s2, b2)
    assert out.shape == (N, out_channel, H, W)
    assert jnp.max(jnp.abs(out - ref)) < 1e-4

    print("KERNEL_OK")
</pallas_src>

<mosaic_0001>
module attributes {stable_mosaic.version = 11 : i64} {
  func.func @_fused_dimred_kernel(%arg0: i32, %arg1: memref<8x512xf32, #tpu.memory_space<vmem>>, %arg2: memref<9x512xf32, #tpu.memory_space<vmem>>, %arg3: memref<8x72xf32, #tpu.memory_space<vmem>>, %arg4: memref<8x1xf32, #tpu.memory_space<vmem>>, %arg5: memref<8x72xf32, #tpu.memory_space<vmem>>, %arg6: memref<8x1xf32, #tpu.memory_space<vmem>>, %arg7: memref<8x512xf32, #tpu.memory_space<vmem>>, %arg8: memref<72x512xf32, #tpu.memory_space<vmem>>) attributes {dimension_semantics = [#tpu.dimension_semantics<parallel>], iteration_bounds = array<i64: 1>, scalar_prefetch = 0 : i64, scratch_operands = 1 : i64, tpu.core_type = #tpu.core_type<tc>, window_params = [{transform_indices = @transform_0, window_bounds = array<i64: 8, 512>}, {pipeline_mode = #tpu.pipeline_mode<synchronous>, transform_indices = @transform_1, window_bounds = array<i64: 9, 512>}, {pipeline_mode = #tpu.pipeline_mode<synchronous>, transform_indices = @transform_2, window_bounds = array<i64: 8, 72>}, {pipeline_mode = #tpu.pipeline_mode<synchronous>, transform_indices = @transform_3, window_bounds = array<i64: 8, 1>}, {pipeline_mode = #tpu.pipeline_mode<synchronous>, transform_indices = @transform_4, window_bounds = array<i64: 8, 72>}, {pipeline_mode = #tpu.pipeline_mode<synchronous>, transform_indices = @transform_5, window_bounds = array<i64: 8, 1>}, {transform_indices = @transform_6, window_bounds = array<i64: 8, 512>}]} {
    %c0 = arith.constant 0 : index
    %c0_0 = arith.constant 0 : index
    %0 = vector.load %arg1[%c0, %c0_0] : memref<8x512xf32, #tpu.memory_space<vmem>>, vector<8x512xf32>
    %c0_1 = arith.constant 0 : index
    %c0_2 = arith.constant 0 : index
    %1 = vector.load %arg3[%c0_1, %c0_2] : memref<8x72xf32, #tpu.memory_space<vmem>>, vector<8x72xf32>
    %c0_3 = arith.constant 0 : index
    %c0_4 = arith.constant 0 : index
    %2 = vector.load %arg4[%c0_3, %c0_4] : memref<8x1xf32, #tpu.memory_space<vmem>>, vector<8x1xf32>
    %c17_i32 = arith.constant 17 : i32
    %3 = tpu.dynamic_rotate %0 by %c17_i32 dim 1 : vector<8x512xf32>, i32 -> vector<8x512xf32>
    %c0_5 = arith.constant 0 : index
    %c0_6 = arith.constant 0 : index
    %4 = vector.load %arg2[%c0_5, %c0_6] : memref<9x512xf32, #tpu.memory_space<vmem>>, vector<1x512xf32>
    %5 = vector.broadcast %4 : vector<1x512xf32> to vector<8x512xf32>
    %6 = arith.mulf %3, %5 : vector<8x512xf32>
    %c0_7 = arith.constant 0 : index
    %c0_8 = arith.constant 0 : index
    %7 = vector.load %arg8[%c0_7, %c0_8] : memref<72x512xf32, #tpu.memory_space<vmem>>, vector<8x512xf32>
    tpu.vector_store %arg8[%c0_7, %c0_8], %6 {strides = array<i32>} : memref<72x512xf32, #tpu.memory_space<vmem>>, vector<8x512xf32>,
    %c16_i32 = arith.constant 16 : i32
    %8 = tpu.dynamic_rotate %0 by %c16_i32 dim 1 : vector<8x512xf32>, i32 -> vector<8x512xf32>
    %c1 = arith.constant 1 : index
    %c0_9 = arith.constant 0 : index
    %9 = vector.load %arg2[%c1, %c0_9] : memref<9x512xf32, #tpu.memory_space<vmem>>, vector<1x512xf32>
    %10 = vector.broadcast %9 : vector<1x512xf32> to vector<8x512xf32>
    %11 = arith.mulf %8, %10 : vector<8x512xf32>
    %c8 = arith.constant 8 : index
    %c0_10 = arith.constant 0 : index
    %12 = vector.load %arg8[%c8, %c0_10] : memref<72x512xf32, #tpu.memory_space<vmem>>, vector<8x512xf32>
    tpu.vector_store %arg8[%c8, %c0_10], %11 {strides = array<i32>} : memref<72x512xf32, #tpu.memory_space<vmem>>, vector<8x512xf32>,
    %c15_i32 = arith.constant 15 : i32
    %13 = tpu.dynamic_rotate %0 by %c15_i32 dim 1 : vector<8x512xf32>, i32 -> vector<8x512xf32>
    %c2 = arith.constant 2 : index
    %c0_11 = arith.constant 0 : index
    %14 = vector.load %arg2[%c2, %c0_11] : memref<9x512xf32, #tpu.memory_space<vmem>>, vector<1x512xf32>
    %15 = vector.broadcast %14 : vector<1x512xf32> to vector<8x512xf32>
    %16 = arith.mulf %13, %15 : vector<8x512xf32>
    %c16 = arith.constant 16 : index
    %c0_12 = arith.constant 0 : index
    %17 = vector.load %arg8[%c16, %c0_12] : memref<72x512xf32, #tpu.memory_space<vmem>>, vector<8x512xf32>
    tpu.vector_store %arg8[%c16, %c0_12], %16 {strides = array<i32>} : memref<72x512xf32, #tpu.memory_space<vmem>>, vector<8x512xf32>,
    %c1_i32 = arith.constant 1 : i32
    %18 = tpu.dynamic_rotate %0 by %c1_i32 dim 1 : vector<8x512xf32>, i32 -> vector<8x512xf32>
    %c3 = arith.constant 3 : index
    %c0_13 = arith.constant 0 : index
    %19 = vector.load %arg2[%c3, %c0_13] : memref<9x512xf32, #tpu.memory_space<vmem>>, vector<1x512xf32>
    %20 = vector.broadcast %19 : vector<1x512xf32> to vector<8x512xf32>
    %21 = arith.mulf %18, %20 : vector<8x512xf32>
    %c24 = arith.constant 24 : index
    %c0_14 = arith.constant 0 : index
    %22 = vector.load %arg8[%c24, %c0_14] : memref<72x512xf32, #tpu.memory_space<vmem>>, vector<8x512xf32>
    tpu.vector_store %arg8[%c24, %c0_14], %21 {strides = array<i32>} : memref<72x512xf32, #tpu.memory_space<vmem>>, vector<8x512xf32>,
    %c32 = arith.constant 32 : index
    %c0_15 = arith.constant 0 : index
    %23 = vector.load %arg8[%c32, %c0_15] : memref<72x512xf32, #tpu.memory_space<vmem>>, vector<8x512xf32>
    tpu.vector_store %arg8[%c32, %c0_15], %0 {strides = array<i32>} : memref<72x512xf32, #tpu.memory_space<vmem>>, vector<8x512xf32>,
    %c511_i32 = arith.constant 511 : i32
    %24 = tpu.dynamic_rotate %0 by %c511_i32 dim 1 : vector<8x512xf32>, i32 -> vector<8x512xf32>
    %c5 = arith.constant 5 : index
    %c0_16 = arith.constant 0 : index
    %25 = vector.load %arg2[%c5, %c0_16] : memref<9x512xf32, #tpu.memory_space<vmem>>, vector<1x512xf32>
    %26 = vector.broadcast %25 : vector<1x512xf32> to vector<8x512xf32>
    %27 = arith.mulf %24, %26 : vector<8x512xf32>
    %c40 = arith.constant 40 : index
    %c0_17 = arith.constant 0 : index
    %28 = vector.load %arg8[%c40, %c0_17] : memref<72x512xf32, #tpu.memory_space<vmem>>, vector<8x512xf32>
    tpu.vector_store %arg8[%c40, %c0_17], %27 {strides = array<i32>} : memref<72x512xf32, #tpu.memory_space<vmem>>, vector<8x512xf32>,
    %c497_i32 = arith.constant 497 : i32
    %29 = tpu.dynamic_rotate %0 by %c497_i32 dim 1 : vector<8x512xf32>, i32 -> vector<8x512xf32>
    %c6 = arith.constant 6 : index
    %c0_18 = arith.constant 0 : index
    %30 = vector.load %arg2[%c6, %c0_18] : memref<9x512xf32, #tpu.memory_space<vmem>>, vector<1x512xf32>
    %31 = vector.broadcast %30 : vector<1x512xf32> to vector<8x512xf32>
    %32 = arith.mulf %29, %31 : vector<8x512xf32>
    %c48 = arith.constant 48 : index
    %c0_19 = arith.constant 0 : index
    %33 = vector.load %arg8[%c48, %c0_19] : memref<72x512xf32, #tpu.memory_space<vmem>>, vector<8x512xf32>
    tpu.vector_store %arg8[%c48, %c0_19], %32 {strides = array<i32>} : memref<72x512xf32, #tpu.memory_space<vmem>>, vector<8x512xf32>,
    %c496_i32 = arith.constant 496 : i32
    %34 = tpu.dynamic_rotate %0 by %c496_i32 dim 1 : vector<8x512xf32>, i32 -> vector<8x512xf32>
    %c7 = arith.constant 7 : index
    %c0_20 = arith.constant 0 : index
    %35 = vector.load %arg2[%c7, %c0_20] : memref<9x512xf32, #tpu.memory_space<vmem>>, vector<1x512xf32>
    %36 = vector.broadcast %35 : vector<1x512xf32> to vector<8x512xf32>
    %37 = arith.mulf %34, %36 : vector<8x512xf32>
    %c56 = arith.constant 56 : index
    %c0_21 = arith.constant 0 : index
    %38 = vector.load %arg8[%c56, %c0_21] : memref<72x512xf32, #tpu.memory_space<vmem>>, vector<8x512xf32>
    tpu.vector_store %arg8[%c56, %c0_21], %37 {strides = array<i32>} : memref<72x512xf32, #tpu.memory_space<vmem>>, vector<8x512xf32>,
    %c495_i32 = arith.constant 495 : i32
    %39 = tpu.dynamic_rotate %0 by %c495_i32 dim 1 : vector<8x512xf32>, i32 -> vector<8x512xf32>
    %c8_22 = arith.constant 8 : index
    %c0_23 = arith.constant 0 : index
    %40 = vector.load %arg2[%c8_22, %c0_23] : memref<9x512xf32, #tpu.memory_space<vmem>>, vector<1x512xf32>
    %41 = vector.broadcast %40 : vector<1x512xf32> to vector<8x512xf32>
    %42 = arith.mulf %39, %41 : vector<8x512xf32>
    %c64 = arith.constant 64 : index
    %c0_24 = arith.constant 0 : index
    %43 = vector.load %arg8[%c64, %c0_24] : memref<72x512xf32, #tpu.memory_space<vmem>>, vector<8x512xf32>
    tpu.vector_store %arg8[%c64, %c0_24], %42 {strides = array<i32>} : memref<72x512xf32, #tpu.memory_space<vmem>>, vector<8x512xf32>,
    %c0_25 = arith.constant 0 : index
    %c0_26 = arith.constant 0 : index
    %44 = vector.load %arg8[%c0_25, %c0_26] : memref<72x512xf32, #tpu.memory_space<vmem>>, vector<72x512xf32>
    %cst = arith.constant dense<0.000000e+00> : vector<8x512xf32>
    %45 = tpu.matmul %1, %44, %cst {dimension_numbers = #tpu.dot_dimension_numbers<[1], [0], [0], [1], [0, 0, 1, 1], [], []>} : vector<8x72xf32>, vector<72x512xf32>, vector<8x512xf32> -> vector<8x512xf32>
    %46 = vector.broadcast %2 : vector<8x1xf32> to vector<8x512xf32>
    %47 = arith.addf %45, %46 : vector<8x512xf32>
    %cst_27 = arith.constant 0.000000e+00 : f32
    %48 = vector.broadcast %cst_27 : f32 to vector<8x512xf32>
    %49 = arith.maximumf %47, %48 : vector<8x512xf32>
    %c0_28 = arith.constant 0 : index
    %c0_29 = arith.constant 0 : index
    %50 = vector.load %arg5[%c0_28, %c0_29] : memref<8x72xf32, #tpu.memory_space<vmem>>, vector<8x72xf32>
    %c0_30 = arith.constant 0 : index
    %c0_31 = arith.constant 0 : index
    %51 = vector.load %arg6[%c0_30, %c0_31] : memref<8x1xf32, #tpu.memory_space<vmem>>, vector<8x1xf32>
    %c17_i32_32 = arith.constant 17 : i32
    %52 = tpu.dynamic_rotate %49 by %c17_i32_32 dim 1 : vector<8x512xf32>, i32 -> vector<8x512xf32>
    %c0_33 = arith.constant 0 : index
    %c0_34 = arith.constant 0 : index
    %53 = vector.load %arg2[%c0_33, %c0_34] : memref<9x512xf32, #tpu.memory_space<vmem>>, vector<1x512xf32>
    %54 = vector.broadcast %53 : vector<1x512xf32> to vector<8x512xf32>
    %55 = arith.mulf %52, %54 : vector<8x512xf32>
    %c0_35 = arith.constant 0 : index
    %c0_36 = arith.constant 0 : index
    %56 = vector.load %arg8[%c0_35, %c0_36] : memref<72x512xf32, #tpu.memory_space<vmem>>, vector<8x512xf32>
    tpu.vector_store %arg8[%c0_35, %c0_36], %55 {strides = array<i32>} : memref<72x512xf32, #tpu.memory_space<vmem>>, vector<8x512xf32>,
    %c16_i32_37 = arith.constant 16 : i32
    %57 = tpu.dynamic_rotate %49 by %c16_i32_37 dim 1 : vector<8x512xf32>, i32 -> vector<8x512xf32>
    %c1_38 = arith.constant 1 : index
    %c0_39 = arith.constant 0 : index
    %58 = vector.load %arg2[%c1_38, %c0_39] : memref<9x512xf32, #tpu.memory_space<vmem>>, vector<1x512xf32>
    %59 = vector.broadcast %58 : vector<1x512xf32> to vector<8x512xf32>
    %60 = arith.mulf %57, %59 : vector<8x512xf32>
    %c8_40 = arith.constant 8 : index
    %c0_41 = arith.constant 0 : index
    %61 = vector.load %arg8[%c8_40, %c0_41] : memref<72x512xf32, #tpu.memory_space<vmem>>, vector<8x512xf32>
    tpu.vector_store %arg8[%c8_40, %c0_41], %60 {strides = array<i32>} : memref<72x512xf32, #tpu.memory_space<vmem>>, vector<8x512xf32>,
    %c15_i32_42 = arith.constant 15 : i32
    %62 = tpu.dynamic_rotate %49 by %c15_i32_42 dim 1 : vector<8x512xf32>, i32 -> vector<8x512xf32>
    %c2_43 = arith.constant 2 : index
    %c0_44 = arith.constant 0 : index
    %63 = vector.load %arg2[%c2_43, %c0_44] : memref<9x512xf32, #tpu.memory_space<vmem>>, vector<1x512xf32>
    %64 = vector.broadcast %63 : vector<1x512xf32> to vector<8x512xf32>
    %65 = arith.mulf %62, %64 : vector<8x512xf32>
    %c16_45 = arith.constant 16 : index
    %c0_46 = arith.constant 0 : index
    %66 = vector.load %arg8[%c16_45, %c0_46] : memref<72x512xf32, #tpu.memory_space<vmem>>, vector<8x512xf32>
    tpu.vector_store %arg8[%c16_45, %c0_46], %65 {strides = array<i32>} : memref<72x512xf32, #tpu.memory_space<vmem>>, vector<8x512xf32>,
    %c1_i32_47 = arith.constant 1 : i32
    %67 = tpu.dynamic_rotate %49 by %c1_i32_47 dim 1 : vector<8x512xf32>, i32 -> vector<8x512xf32>
    %c3_48 = arith.constant 3 : index
    %c0_49 = arith.constant 0 : index
    %68 = vector.load %arg2[%c3_48, %c0_49] : memref<9x512xf32, #tpu.memory_space<vmem>>, vector<1x512xf32>
    %69 = vector.broadcast %68 : vector<1x512xf32> to vector<8x512xf32>
    %70 = arith.mulf %67, %69 : vector<8x512xf32>
    %c24_50 = arith.constant 24 : index
    %c0_51 = arith.constant 0 : index
    %71 = vector.load %arg8[%c24_50, %c0_51] : memref<72x512xf32, #tpu.memory_space<vmem>>, vector<8x512xf32>
    tpu.vector_store %arg8[%c24_50, %c0_51], %70 {strides = array<i32>} : memref<72x512xf32, #tpu.memory_space<vmem>>, vector<8x512xf32>,
    %c32_52 = arith.constant 32 : index
    %c0_53 = arith.constant 0 : index
    %72 = vector.load %arg8[%c32_52, %c0_53] : memref<72x512xf32, #tpu.memory_space<vmem>>, vector<8x512xf32>
    tpu.vector_store %arg8[%c32_52, %c0_53], %49 {strides = array<i32>} : memref<72x512xf32, #tpu.memory_space<vmem>>, vector<8x512xf32>,
    %c511_i32_54 = arith.constant 511 : i32
    %73 = tpu.dynamic_rotate %49 by %c511_i32_54 dim 1 : vector<8x512xf32>, i32 -> vector<8x512xf32>
    %c5_55 = arith.constant 5 : index
    %c0_56 = arith.constant 0 : index
    %74 = vector.load %arg2[%c5_55, %c0_56] : memref<9x512xf32, #tpu.memory_space<vmem>>, vector<1x512xf32>
    %75 = vector.broadcast %74 : vector<1x512xf32> to vector<8x512xf32>
    %76 = arith.mulf %73, %75 : vector<8x512xf32>
    %c40_57 = arith.constant 40 : index
    %c0_58 = arith.constant 0 : index
    %77 = vector.load %arg8[%c40_57, %c0_58] : memref<72x512xf32, #tpu.memory_space<vmem>>, vector<8x512xf32>
    tpu.vector_store %arg8[%c40_57, %c0_58], %76 {strides = array<i32>} : memref<72x512xf32, #tpu.memory_space<vmem>>, vector<8x512xf32>,
    %c497_i32_59 = arith.constant 497 : i32
    %78 = tpu.dynamic_rotate %49 by %c497_i32_59 dim 1 : vector<8x512xf32>, i32 -> vector<8x512xf32>
    %c6_60 = arith.constant 6 : index
    %c0_61 = arith.constant 0 : index
    %79 = vector.load %arg2[%c6_60, %c0_61] : memref<9x512xf32, #tpu.memory_space<vmem>>, vector<1x512xf32>
    %80 = vector.broadcast %79 : vector<1x512xf32> to vector<8x512xf32>
    %81 = arith.mulf %78, %80 : vector<8x512xf32>
    %c48_62 = arith.constant 48 : index
    %c0_63 = arith.constant 0 : index
    %82 = vector.load %arg8[%c48_62, %c0_63] : memref<72x512xf32, #tpu.memory_space<vmem>>, vector<8x512xf32>
    tpu.vector_store %arg8[%c48_62, %c0_63], %81 {strides = array<i32>} : memref<72x512xf32, #tpu.memory_space<vmem>>, vector<8x512xf32>,
    %c496_i32_64 = arith.constant 496 : i32
    %83 = tpu.dynamic_rotate %49 by %c496_i32_64 dim 1 : vector<8x512xf32>, i32 -> vector<8x512xf32>
    %c7_65 = arith.constant 7 : index
    %c0_66 = arith.constant 0 : index
    %84 = vector.load %arg2[%c7_65, %c0_66] : memref<9x512xf32, #tpu.memory_space<vmem>>, vector<1x512xf32>
    %85 = vector.broadcast %84 : vector<1x512xf32> to vector<8x512xf32>
    %86 = arith.mulf %83, %85 : vector<8x512xf32>
    %c56_67 = arith.constant 56 : index
    %c0_68 = arith.constant 0 : index
    %87 = vector.load %arg8[%c56_67, %c0_68] : memref<72x512xf32, #tpu.memory_space<vmem>>, vector<8x512xf32>
    tpu.vector_store %arg8[%c56_67, %c0_68], %86 {strides = array<i32>} : memref<72x512xf32, #tpu.memory_space<vmem>>, vector<8x512xf32>,
    %c495_i32_69 = arith.constant 495 : i32
    %88 = tpu.dynamic_rotate %49 by %c495_i32_69 dim 1 : vector<8x512xf32>, i32 -> vector<8x512xf32>
    %c8_70 = arith.constant 8 : index
    %c0_71 = arith.constant 0 : index
    %89 = vector.load %arg2[%c8_70, %c0_71] : memref<9x512xf32, #tpu.memory_space<vmem>>, vector<1x512xf32>
    %90 = vector.broadcast %89 : vector<1x512xf32> to vector<8x512xf32>
    %91 = arith.mulf %88, %90 : vector<8x512xf32>
    %c64_72 = arith.constant 64 : index
    %c0_73 = arith.constant 0 : index
    %92 = vector.load %arg8[%c64_72, %c0_73] : memref<72x512xf32, #tpu.memory_space<vmem>>, vector<8x512xf32>
    tpu.vector_store %arg8[%c64_72, %c0_73], %91 {strides = array<i32>} : memref<72x512xf32, #tpu.memory_space<vmem>>, vector<8x512xf32>,
    %c0_74 = arith.constant 0 : index
    %c0_75 = arith.constant 0 : index
    %93 = vector.load %arg8[%c0_74, %c0_75] : memref<72x512xf32, #tpu.memory_space<vmem>>, vector<72x512xf32>
    %cst_76 = arith.constant dense<0.000000e+00> : vector<8x512xf32>
    %94 = tpu.matmul %50, %93, %cst_76 {dimension_numbers = #tpu.dot_dimension_numbers<[1], [0], [0], [1], [0, 0, 1, 1], [], []>} : vector<8x72xf32>, vector<72x512xf32>, vector<8x512xf32> -> vector<8x512xf32>
    %95 = vector.broadcast %51 : vector<8x1xf32> to vector<8x512xf32>
    %96 = arith.addf %94, %95 : vector<8x512xf32>
    %cst_77 = arith.constant 0.000000e+00 : f32
    %97 = vector.broadcast %cst_77 : f32 to vector<8x512xf32>
    %98 = arith.maximumf %96, %97 : vector<8x512xf32>
    %c0_78 = arith.constant 0 : index
    %c0_79 = arith.constant 0 : index
    %99 = vector.load %arg7[%c0_78, %c0_79] : memref<8x512xf32, #tpu.memory_space<vmem>>, vector<8x512xf32>
    tpu.vector_store %arg7[%c0_78, %c0_79], %98 {strides = array<i32>} : memref<8x512xf32, #tpu.memory_space<vmem>>, vector<8x512xf32>,
    return
  }
  func.func @transform_0(%arg0: i32) -> (i32, i32) {
    %c0_i32 = arith.constant 0 : i32
    %c0_i32_0 = arith.constant 0 : i32
    return %c0_i32, %arg0 : i32, i32
  }
  func.func @transform_1(%arg0: i32) -> (i32, i32) {
    %c0_i32 = arith.constant 0 : i32
    %c0_i32_0 = arith.constant 0 : i32
    %c0_i32_1 = arith.constant 0 : i32
    return %c0_i32, %c0_i32_0 : i32, i32
  }
  func.func @transform_2(%arg0: i32) -> (i32, i32) {
    %c0_i32 = arith.constant 0 : i32
    %c0_i32_0 = arith.constant 0 : i32
    %c0_i32_1 = arith.constant 0 : i32
    return %c0_i32, %c0_i32_0 : i32, i32
  }
  func.func @transform_3(%arg0: i32) -> (i32, i32) {
    %c0_i32 = arith.constant 0 : i32
    %c0_i32_0 = arith.constant 0 : i32
    %c0_i32_1 = arith.constant 0 : i32
    return %c0_i32, %c0_i32_0 : i32, i32
  }
  func.func @transform_4(%arg0: i32) -> (i32, i32) {
    %c0_i32 = arith.constant 0 : i32
    %c0_i32_0 = arith.constant 0 : i32
    %c0_i32_1 = arith.constant 0 : i32
    return %c0_i32, %c0_i32_0 : i32, i32
  }
  func.func @transform_5(%arg0: i32) -> (i32, i32) {
    %c0_i32 = arith.constant 0 : i32
    %c0_i32_0 = arith.constant 0 : i32
    %c0_i32_1 = arith.constant 0 : i32
    return %c0_i32, %c0_i32_0 : i32, i32
  }
  func.func @transform_6(%arg0: i32) -> (i32, i32) {
    %c0_i32 = arith.constant 0 : i32
    %c0_i32_0 = arith.constant 0 : i32
    return %c0_i32, %arg0 : i32, i32
  }
}

</mosaic_0001>

<llo_original>
// kernel: dimensional_reduction.1
$region0: #{dimensional_reduction.1}
  #allocation0 [shape = 'u32[]', space=smem, size = 0x4, offset = 0x4, fixed_abs, tag = 'smem constant byte address 0x4 - core index']
  #allocation1 [shape = 'u32[144,128]{1,0:T(1,128)}', space=vmem, size = 0x12000, scoped, tag = 'internal scratch']
  #allocation2 [shape = 'f32[72,512]{1,0:T(8,128)}', space=vmem, size = 0x24000, scoped, tag = 'scratch operand']
  %s0 = inlined_call_operand.vmem [shape: f32[8,512], index: 0, kind: input, shape index: {}]
  %s1 = inlined_call_operand.vmem [shape: f32[9,512], index: 1, kind: input, shape index: {}]
  %s2 = inlined_call_operand.vmem [shape: f32[8,72], index: 2, kind: input, shape index: {}]
  %s3 = inlined_call_operand.vmem [shape: f32[8,1], index: 3, kind: input, shape index: {}]
  %s4 = inlined_call_operand.vmem [shape: f32[8,72], index: 4, kind: input, shape index: {}]
  %s5 = inlined_call_operand.vmem [shape: f32[8,1], index: 5, kind: input, shape index: {}]
  %s6 = inlined_call_operand.vmem [shape: f32[8,512], index: 6, kind: output, shape index: {}]
  %s7 = sld [smem:[#allocation0]]
  $region34: #{dimensional_reduction.1} parent=0
    _
  %s9 = ssub.s32 1, %s7
  %s10 = scalar_select 0, %s9, %s7
  // Predicated region
  $region2: #{dimensional_reduction.1} parent=0 // pred_check
    _
  $region3: #{dimensional_reduction.1} parent=0 // pred_check_branch
    %12 = sbr.rel (0) target = $region5
  $region4: #{dimensional_reduction.1} parent=0 // pred_region
    _
  $region5: #{dimensional_reduction.1} parent=0 // pred_fallthru
    _
  // Predicated region
  $region6: #{dimensional_reduction.1} parent=0 // pred_check
    _
  $region7: #{dimensional_reduction.1} parent=0 // pred_check_branch
    %14 = sbr.rel (0) target = $region9
  $region8: #{dimensional_reduction.1} parent=0 // pred_region
    _
  $region9: #{dimensional_reduction.1} parent=0 // pred_fallthru
    _
  // Predicated region
  $region10: #{dimensional_reduction.1} parent=0 // pred_check
    _
  $region11: #{dimensional_reduction.1} parent=0 // pred_check_branch
    %16 = sbr.rel (0) target = $region13
  $region12: #{dimensional_reduction.1} parent=0 // pred_region
    _
  $region13: #{dimensional_reduction.1} parent=0 // pred_fallthru
    _
  // Predicated region
  $region14: #{dimensional_reduction.1} parent=0 // pred_check
    _
  $region15: #{dimensional_reduction.1} parent=0 // pred_check_branch
    %18 = sbr.rel (0) target = $region17
  $region16: #{dimensional_reduction.1} parent=0 // pred_region
    _
  $region17: #{dimensional_reduction.1} parent=0 // pred_fallthru
    _
  // Predicated region
  $region18: #{dimensional_reduction.1} parent=0 // pred_check
    _
  $region19: #{dimensional_reduction.1} parent=0 // pred_check_branch
    %20 = sbr.rel (0) target = $region21
  $region20: #{dimensional_reduction.1} parent=0 // pred_region
    _
  $region21: #{dimensional_reduction.1} parent=0 // pred_fallthru
    _
  // Predicated region
  $region22: #{dimensional_reduction.1} parent=0 // pred_check
    _
  $region23: #{dimensional_reduction.1} parent=0 // pred_check_branch
    %22 = sbr.rel (0) target = $region25
  $region24: #{dimensional_reduction.1} parent=0 // pred_region
    _
  $region25: #{dimensional_reduction.1} parent=0 // pred_fallthru
    _
  %v23 = vld [vmem:[%s0] sm:$0xff]
  %v24 = vld [vmem:[%s0 + $0x8] sm:$0xff]
  %v25 = vld [vmem:[%s0 + $0x10] sm:$0xff]
  %v26 = vld [vmem:[%s0 + $0x18] sm:$0xff]
  %v27 = vld [vmem:[%s2] sm:$0xff]
  %v28 = vld [vmem:[%s3] sm:$0xff]
  %29 = vrot.lane.b32.xlu0 %v23, 17
  %v30 = vpop.permute.xlu0 %29
  %31 = vrot.lane.b32.xlu0 %v24, 17
  %v32 = vpop.permute.xlu0 %31
  %33 = vrot.lane.b32.xlu0 %v25, 17
  %v34 = vpop.permute.xlu0 %33
  %35 = vrot.lane.b32.xlu0 %v26, 17
  %v36 = vpop.permute.xlu0 %35
  %v37 = vlaneseq
  %v38 = vand.u32 %v37, 127
  %vm39 = vcmp.lt.s32.totalorder %v38, 17
  %v40 = vsel %vm39, %v34, %v36
  %v41 = vsel %vm39, %v32, %v34
  %v42 = vsel %vm39, %v30, %v32
  %v43 = vsel %vm39, %v36, %v30
  %v44 = vld [vmem:[%s1] ss:$8 sm:$0xf]
  %v46 = vlaneseq
  %v47 = vshrl.u32 %v46, 7
  %v48 = vsub.s32 0, %v47
  %v49 = vrot.slane %v44, %v48
  %v50 = vlaneseq
  %v51 = vshrl.u32 %v50, 7
  %v52 = vsub.s32 1, %v51
  %v53 = vrot.slane %v44, %v52
  %v54 = vlaneseq
  %v55 = vshrl.u32 %v54, 7
  %v56 = vsub.s32 2, %v55
  %v57 = vrot.slane %v44, %v56
  %v58 = vlaneseq
  %v59 = vshrl.u32 %v58, 7
  %v60 = vsub.s32 3, %v59
  %v61 = vrot.slane %v44, %v60
  %v66 = vmul.f32 %v43, %v49
  %v67 = vmul.f32 %v42, %v53
  %v68 = vmul.f32 %v41, %v57
  %v69 = vmul.f32 %v40, %v61
  %70 = vst [vmem:[#allocation2] sm:$0xff] %v66
  %71 = vst [vmem:[#allocation2 + $0x8] sm:$0xff] %v67
  %72 = vst [vmem:[#allocation2 + $0x10] sm:$0xff] %v68
  %73 = vst [vmem:[#allocation2 + $0x18] sm:$0xff] %v69
  %74 = vrot.lane.b32.xlu0 %v23, 16
  %v75 = vpop.permute.xlu0 %74
  %76 = vrot.lane.b32.xlu0 %v24, 16
  %v77 = vpop.permute.xlu0 %76
  %78 = vrot.lane.b32.xlu0 %v25, 16
  %v79 = vpop.permute.xlu0 %78
  %80 = vrot.lane.b32.xlu0 %v26, 16
  %v81 = vpop.permute.xlu0 %80
  %vm82 = vcmp.lt.s32.totalorder %v38, 16
  %v83 = vsel %vm82, %v79, %v81
  %v84 = vsel %vm82, %v77, %v79
  %v85 = vsel %vm82, %v75, %v77
  %v86 = vsel %vm82, %v81, %v75
  %s87 = scalar_lea.vmem %s1, 1
  %v88 = vld [vmem:[%s87] ss:$8 sm:$0xf]
  %v90 = vlaneseq
  %v91 = vshrl.u32 %v90, 7
  %v92 = vsub.s32 0, %v91
  %v93 = vrot.slane %v88, %v92
  %v94 = vlaneseq
  %v95 = vshrl.u32 %v94, 7
  %v96 = vsub.s32 1, %v95
  %v97 = vrot.slane %v88, %v96
  %v98 = vlaneseq
  %v99 = vshrl.u32 %v98, 7
  %v100 = vsub.s32 2, %v99
  %v101 = vrot.slane %v88, %v100
  %v102 = vlaneseq
  %v103 = vshrl.u32 %v102, 7
  %v104 = vsub.s32 3, %v103
  %v105 = vrot.slane %v88, %v104
  %v110 = vmul.f32 %v86, %v93
  %v111 = vmul.f32 %v85, %v97
  %v112 = vmul.f32 %v84, %v101
  %v113 = vmul.f32 %v83, %v105
  %114 = vst [vmem:[#allocation2 + $0x20] sm:$0xff] %v110
  %115 = vst [vmem:[#allocation2 + $0x28] sm:$0xff] %v111
  %116 = vst [vmem:[#allocation2 + $0x30] sm:$0xff] %v112
  %117 = vst [vmem:[#allocation2 + $0x38] sm:$0xff] %v113
  %118 = vrot.lane.b32.xlu0 %v23, 15
  %v119 = vpop.permute.xlu0 %118
  %120 = vrot.lane.b32.xlu0 %v24, 15
  %v121 = vpop.permute.xlu0 %120
  %122 = vrot.lane.b32.xlu0 %v25, 15
  %v123 = vpop.permute.xlu0 %122
  %124 = vrot.lane.b32.xlu0 %v26, 15
  %v125 = vpop.permute.xlu0 %124
  %vm126 = vcmp.lt.s32.totalorder %v38, 15
  %v127 = vsel %vm126, %v123, %v125
  %v128 = vsel %vm126, %v121, %v123
  %v129 = vsel %vm126, %v119, %v121
  %v130 = vsel %vm126, %v125, %v119
  %s131 = scalar_lea.vmem %s1, 2
  %v132 = vld [vmem:[%s131] ss:$8 sm:$0xf]
  %v134 = vlaneseq
  %v135 = vshrl.u32 %v134, 7
  %v136 = vsub.s32 0, %v135
  %v137 = vrot.slane %v132, %v136
  %v138 = vlaneseq
  %v139 = vshrl.u32 %v138, 7
  %v140 = vsub.s32 1, %v139
  %v141 = vrot.slane %v132, %v140
  %v142 = vlaneseq
  %v143 = vshrl.u32 %v142, 7
  %v144 = vsub.s32 2, %v143
  %v145 = vrot.slane %v132, %v144
  %v146 = vlaneseq
  %v147 = vshrl.u32 %v146, 7
  %v148 = vsub.s32 3, %v147
  %v149 = vrot.slane %v132, %v148
  %v154 = vmul.f32 %v130, %v137
  %v155 = vmul.f32 %v129, %v141
  %v156 = vmul.f32 %v128, %v145
  %v157 = vmul.f32 %v127, %v149
  %158 = vst [vmem:[#allocation2 + $0x40] sm:$0xff] %v154
  %159 = vst [vmem:[#allocation2 + $0x48] sm:$0xff] %v155
  %160 = vst [vmem:[#allocation2 + $0x50] sm:$0xff] %v156
  %161 = vst [vmem:[#allocation2 + $0x58] sm:$0xff] %v157
  %162 = vrot.lane.b32.xlu0 %v23, 1
  %v163 = vpop.permute.xlu0 %162
  %164 = vrot.lane.b32.xlu0 %v24, 1
  %v165 = vpop.permute.xlu0 %164
  %166 = vrot.lane.b32.xlu0 %v25, 1
  %v167 = vpop.permute.xlu0 %166
  %168 = vrot.lane.b32.xlu0 %v26, 1
  %v169 = vpop.permute.xlu0 %168
  %vm170 = vcmp.lt.s32.totalorder %v38, 1
  %v171 = vsel %vm170, %v167, %v169
  %v172 = vsel %vm170, %v165, %v167
  %v173 = vsel %vm170, %v163, %v165
  %v174 = vsel %vm170, %v169, %v163
  %s175 = scalar_lea.vmem %s1, 3
  %v176 = vld [vmem:[%s175] ss:$8 sm:$0xf]
  %v178 = vlaneseq
  %v179 = vshrl.u32 %v178, 7
  %v180 = vsub.s32 0, %v179
  %v181 = vrot.slane %v176, %v180
  %v182 = vlaneseq
  %v183 = vshrl.u32 %v182, 7
  %v184 = vsub.s32 1, %v183
  %v185 = vrot.slane %v176, %v184
  %v186 = vlaneseq
  %v187 = vshrl.u32 %v186, 7
  %v188 = vsub.s32 2, %v187
  %v189 = vrot.slane %v176, %v188
  %v190 = vlaneseq
  %v191 = vshrl.u32 %v190, 7
  %v192 = vsub.s32 3, %v191
  %v193 = vrot.slane %v176, %v192
  %v198 = vmul.f32 %v174, %v181
  %v199 = vmul.f32 %v173, %v185
  %v200 = vmul.f32 %v172, %v189
  %v201 = vmul.f32 %v171, %v193
  %202 = vst [vmem:[#allocation2 + $0x60] sm:$0xff] %v198
  %203 = vst [vmem:[#allocation2 + $0x68] sm:$0xff] %v199
  %204 = vst [vmem:[#allocation2 + $0x70] sm:$0xff] %v200
  %205 = vst [vmem:[#allocation2 + $0x78] sm:$0xff] %v201
  %206 = vst [vmem:[#allocation2 + $0x80] sm:$0xff] %v23
  %207 = vst [vmem:[#allocation2 + $0x88] sm:$0xff] %v24
  %208 = vst [vmem:[#allocation2 + $0x90] sm:$0xff] %v25
  %209 = vst [vmem:[#allocation2 + $0x98] sm:$0xff] %v26
  %210 = vrot.lane.b32.xlu0 %v23, 127
  %v211 = vpop.permute.xlu0 %210
  %212 = vrot.lane.b32.xlu0 %v24, 127
  %v213 = vpop.permute.xlu0 %212
  %214 = vrot.lane.b32.xlu0 %v25, 127
  %v215 = vpop.permute.xlu0 %214
  %216 = vrot.lane.b32.xlu0 %v26, 127
  %v217 = vpop.permute.xlu0 %216
  %vm218 = vcmp.lt.s32.totalorder %v38, 127
  %v219 = vsel %vm218, %v215, %v217
  %v220 = vsel %vm218, %v213, %v215
  %v221 = vsel %vm218, %v211, %v213
  %v222 = vsel %vm218, %v217, %v211
  %s223 = scalar_lea.vmem %s1, 5
  %v224 = vld [vmem:[%s223] ss:$8 sm:$0xf]
  %v226 = vlaneseq
  %v227 = vshrl.u32 %v226, 7
  %v228 = vsub.s32 0, %v227
  %v229 = vrot.slane %v224, %v228
  %v230 = vlaneseq
  %v231 = vshrl.u32 %v230, 7
  %v232 = vsub.s32 1, %v231
  %v233 = vrot.slane %v224, %v232
  %v234 = vlaneseq
  %v235 = vshrl.u32 %v234, 7
  %v236 = vsub.s32 2, %v235
  %v237 = vrot.slane %v224, %v236
  %v238 = vlaneseq
  %v239 = vshrl.u32 %v238, 7
  %v240 = vsub.s32 3, %v239
  %v241 = vrot.slane %v224, %v240
  %v246 = vmul.f32 %v221, %v229
  %v247 = vmul.f32 %v220, %v233
  %v248 = vmul.f32 %v219, %v237
  %v249 = vmul.f32 %v222, %v241
  %250 = vst [vmem:[#allocation2 + $0xa0] sm:$0xff] %v246
  %251 = vst [vmem:[#allocation2 + $0xa8] sm:$0xff] %v247
  %252 = vst [vmem:[#allocation2 + $0xb0] sm:$0xff] %v248
  %253 = vst [vmem:[#allocation2 + $0xb8] sm:$0xff] %v249
  %254 = vrot.lane.b32.xlu0 %v23, 113
  %v255 = vpop.permute.xlu0 %254
  %256 = vrot.lane.b32.xlu0 %v24, 113
  %v257 = vpop.permute.xlu0 %256
  %258 = vrot.lane.b32.xlu0 %v25, 113
  %v259 = vpop.permute.xlu0 %258
  %260 = vrot.lane.b32.xlu0 %v26, 113
  %v261 = vpop.permute.xlu0 %260
  %vm262 = vcmp.lt.s32.totalorder %v38, 113
  %v263 = vsel %vm262, %v259, %v261
  %v264 = vsel %vm262, %v257, %v259
  %v265 = vsel %vm262, %v255, %v257
  %v266 = vsel %vm262, %v261, %v255
  %s267 = scalar_lea.vmem %s1, 6
  %v268 = vld [vmem:[%s267] ss:$8 sm:$0xf]
  %v270 = vlaneseq
  %v271 = vshrl.u32 %v270, 7
  %v272 = vsub.s32 0, %v271
  %v273 = vrot.slane %v268, %v272
  %v274 = vlaneseq
  %v275 = vshrl.u32 %v274, 7
  %v276 = vsub.s32 1, %v275
  %v277 = vrot.slane %v268, %v276
  %v278 = vlaneseq
  %v279 = vshrl.u32 %v278, 7
  %v280 = vsub.s32 2, %v279
  %v281 = vrot.slane %v268, %v280
  %v282 = vlaneseq
  %v283 = vshrl.u32 %v282, 7
  %v284 = vsub.s32 3, %v283
  %v285 = vrot.slane %v268, %v284
  %v290 = vmul.f32 %v265, %v273
  %v291 = vmul.f32 %v264, %v277
  %v292 = vmul.f32 %v263, %v281
  %v293 = vmul.f32 %v266, %v285
  %294 = vst [vmem:[#allocation2 + $0xc0] sm:$0xff] %v290
  %295 = vst [vmem:[#allocation2 + $0xc8] sm:$0xff] %v291
  %296 = vst [vmem:[#allocation2 + $0xd0] sm:$0xff] %v292
  %297 = vst [vmem:[#allocation2 + $0xd8] sm:$0xff] %v293
  %298 = vrot.lane.b32.xlu0 %v23, 112
  %v299 = vpop.permute.xlu0 %298
  %300 = vrot.lane.b32.xlu0 %v24, 112
  %v301 = vpop.permute.xlu0 %300
  %302 = vrot.lane.b32.xlu0 %v25, 112
  %v303 = vpop.permute.xlu0 %302
  %304 = vrot.lane.b32.xlu0 %v26, 112
  %v305 = vpop.permute.xlu0 %304
  %vm306 = vcmp.lt.s32.totalorder %v38, 112
  %v307 = vsel %vm306, %v303, %v305
  %v308 = vsel %vm306, %v301, %v303
  %v309 = vsel %vm306, %v299, %v301
  %v310 = vsel %vm306, %v305, %v299
  %s311 = scalar_lea.vmem %s1, 7
  %v312 = vld [vmem:[%s311] ss:$8 sm:$0xf]
  %v314 = vlaneseq
  %v315 = vshrl.u32 %v314, 7
  %v316 = vsub.s32 0, %v315
  %v317 = vrot.slane %v312, %v316
  %v318 = vlaneseq
  %v319 = vshrl.u32 %v318, 7
  %v320 = vsub.s32 1, %v319
  %v321 = vrot.slane %v312, %v320
  %v322 = vlaneseq
  %v323 = vshrl.u32 %v322, 7
  %v324 = vsub.s32 2, %v323
  %v325 = vrot.slane %v312, %v324
  %v326 = vlaneseq
  %v327 = vshrl.u32 %v326, 7
  %v328 = vsub.s32 3, %v327
  %v329 = vrot.slane %v312, %v328
  %v334 = vmul.f32 %v309, %v317
  %v335 = vmul.f32 %v308, %v321
  %v336 = vmul.f32 %v307, %v325
  %v337 = vmul.f32 %v310, %v329
  %338 = vst [vmem:[#allocation2 + $0xe0] sm:$0xff] %v334
  %339 = vst [vmem:[#allocation2 + $0xe8] sm:$0xff] %v335
  %340 = vst [vmem:[#allocation2 + $0xf0] sm:$0xff] %v336
  %341 = vst [vmem:[#allocation2 + $0xf8] sm:$0xff] %v337
  %342 = vrot.lane.b32.xlu0 %v23, 111
  %v343 = vpop.permute.xlu0 %342
  %344 = vrot.lane.b32.xlu0 %v24, 111
  %v345 = vpop.permute.xlu0 %344
  %346 = vrot.lane.b32.xlu0 %v25, 111
  %v347 = vpop.permute.xlu0 %346
  %348 = vrot.lane.b32.xlu0 %v26, 111
  %v349 = vpop.permute.xlu0 %348
  %vm350 = vcmp.lt.s32.totalorder %v38, 111
  %v351 = vsel %vm350, %v347, %v349
  %v352 = vsel %vm350, %v345, %v347
  %v353 = vsel %vm350, %v343, %v345
  %v354 = vsel %vm350, %v349, %v343
  %s355 = scalar_lea.vmem %s1, 32
  %v356 = vld [vmem:[%s355] ss:$8 sm:$0xf]
  %v358 = vlaneseq
  %v359 = vshrl.u32 %v358, 7
  %v360 = vsub.s32 0, %v359
  %v361 = vrot.slane %v356, %v360
  %v362 = vlaneseq
  %v363 = vshrl.u32 %v362, 7
  %v364 = vsub.s32 1, %v363
  %v365 = vrot.slane %v356, %v364
  %v366 = vlaneseq
  %v367 = vshrl.u32 %v366, 7
  %v368 = vsub.s32 2, %v367
  %v369 = vrot.slane %v356, %v368
  %v370 = vlaneseq
  %v371 = vshrl.u32 %v370, 7
  %v372 = vsub.s32 3, %v371
  %v373 = vrot.slane %v356, %v372
  %v378 = vmul.f32 %v353, %v361
  %v379 = vmul.f32 %v352, %v365
  %v380 = vmul.f32 %v351, %v369
  %v381 = vmul.f32 %v354, %v373
  %382 = vst [vmem:[#allocation2 + $0x100] sm:$0xff] %v378
  %383 = vst [vmem:[#allocation2 + $0x108] sm:$0xff] %v379
  %384 = vst [vmem:[#allocation2 + $0x110] sm:$0xff] %v380
  %385 = vst [vmem:[#allocation2 + $0x118] sm:$0xff] %v381
  %v386 = vld [vmem:[#allocation2] sm:$0xff]
  %v387 = vld [vmem:[#allocation2 + $0x8] sm:$0xff]
  %v388 = vld [vmem:[#allocation2 + $0x10] sm:$0xff]
  %v389 = vld [vmem:[#allocation2 + $0x18] sm:$0xff]
  %v390 = vld [vmem:[#allocation2 + $0x20] sm:$0xff]
  %v391 = vld [vmem:[#allocation2 + $0x28] sm:$0xff]
  %v392 = vld [vmem:[#allocation2 + $0x30] sm:$0xff]
  %v393 = vld [vmem:[#allocation2 + $0x38] sm:$0xff]
  %v394 = vld [vmem:[#allocation2 + $0x40] sm:$0xff]
  %v395 = vld [vmem:[#allocation2 + $0x48] sm:$0xff]
  %v396 = vld [vmem:[#allocation2 + $0x50] sm:$0xff]
  %v397 = vld [vmem:[#allocation2 + $0x58] sm:$0xff]
  %v398 = vld [vmem:[#allocation2 + $0x60] sm:$0xff]
  %v399 = vld [vmem:[#allocation2 + $0x68] sm:$0xff]
  %v400 = vld [vmem:[#allocation2 + $0x70] sm:$0xff]
  %v401 = vld [vmem:[#allocation2 + $0x78] sm:$0xff]
  %v402 = vld [vmem:[#allocation2 + $0x80] sm:$0xff]
  %v403 = vld [vmem:[#allocation2 + $0x88] sm:$0xff]
  %v404 = vld [vmem:[#allocation2 + $0x90] sm:$0xff]
  %v405 = vld [vmem:[#allocation2 + $0x98] sm:$0xff]
  %v406 = vld [vmem:[#allocation2 + $0xa0] sm:$0xff]
  %v407 = vld [vmem:[#allocation2 + $0xa8] sm:$0xff]
  %v408 = vld [vmem:[#allocation2 + $0xb0] sm:$0xff]
  %v409 = vld [vmem:[#allocation2 + $0xb8] sm:$0xff]
  %v410 = vld [vmem:[#allocation2 + $0xc0] sm:$0xff]
  %v411 = vld [vmem:[#allocation2 + $0xc8] sm:$0xff]
  %v412 = vld [vmem:[#allocation2 + $0xd0] sm:$0xff]
  %v413 = vld [vmem:[#allocation2 + $0xd8] sm:$0xff]
  %v414 = vld [vmem:[#allocation2 + $0xe0] sm:$0xff]
  %v415 = vld [vmem:[#allocation2 + $0xe8] sm:$0xff]
  %v416 = vld [vmem:[#allocation2 + $0xf0] sm:$0xff]
  %v417 = vld [vmem:[#allocation2 + $0xf8] sm:$0xff]
  %v418 = vld [vmem:[#allocation2 + $0x100] sm:$0xff]
  %v419 = vld [vmem:[#allocation2 + $0x108] sm:$0xff]
  %v420 = vld [vmem:[#allocation2 + $0x110] sm:$0xff]
  %v421 = vld [vmem:[#allocation2 + $0x118] sm:$0xff]
  %423 = vset.pattern.permute.xlu0 0
  %424 = vperm.xlu0 %423, %v28
  %v425 = vpop.permute.xlu0 %424
  %vm427 = vcmask 588800
  %v429 = vsel %vm427, %v27, 0
  %431 = vmatprep.subr.mxu0 %v387
  %432 = vmatpush1.msra.mxu0 %v386
  %433 = vmatprep.subr.mxu0 %v391
  %434 = vmatpush1.msra.mxu0 %v390
  %435 = vmatprep.subr.mxu0 %v395
  %436 = vmatpush1.msra.mxu0 %v394
  %437 = vmatprep.subr.mxu0 %v399
  %438 = vmatpush1.msra.mxu0 %v398
  %439 = vmatprep.subr.mxu0 %v403
  %440 = vmatpush1.msra.mxu0 %v402
  %441 = vmatprep.subr.mxu0 %v407
  %442 = vmatpush1.msra.mxu0 %v406
  %443 = vmatprep.subr.mxu0 %v411
  %444 = vmatpush1.msra.mxu0 %v410
  %445 = vmatprep.subr.mxu0 %v415
  %446 = vmatpush1.msra.mxu0 %v414
  %447 = vmatprep.subr.mxu0 %v419
  %448 = vmatpush1.msra.mxu0 %v418
  %449 = vmatprep.subr.mxu0 0.0
  %450 = vmatpush1.msra.mxu0 0.0
  %451 = vmatprep.subr.mxu0 0.0
  %452 = vmatpush1.msra.mxu0 0.0
  %453 = vmatprep.subr.mxu0 0.0
  %454 = vmatpush1.msra.mxu0 0.0
  %455 = vmatprep.subr.mxu0 0.0
  %456 = vmatpush1.msra.mxu0 0.0
  %457 = vmatprep.subr.mxu0 0.0
  %458 = vmatpush1.msra.mxu0 0.0
  %459 = vmatprep.subr.mxu0 0.0
  %460 = vmatpush1.msra.mxu0 0.0
  %461 = vmatprep.subr.mxu0 0.0
  %462 = vmatpush1.msra.mxu0 0.0
  %463 = vmatprep.subr.mxu0 0.0
  %464 = vmatpush1.msra.mxu0 0.0
  %465 = vmatprep.subr.mxu0 0.0
  %466 = vmatpush1.msra.mxu0 0.0
  %467 = vmatprep.subr.mxu0 0.0
  %468 = vmatpush1.msra.mxu0 0.0
  %469 = vmatprep.subr.mxu0 0.0
  %470 = vmatpush1.msra.mxu0 0.0
  %471 = vmatprep.subr.mxu0 0.0
  %472 = vmatpush1.msra.mxu0 0.0
  %473 = vmatprep.subr.mxu0 0.0
  %474 = vmatpush1.msra.mxu0 0.0
  %475 = vmatprep.subr.mxu0 0.0
  %476 = vmatpush1.msra.mxu0 0.0
  %477 = vmatprep.subr.mxu0 0.0
  %478 = vmatpush1.msra.mxu0 0.0
  %479 = vmatprep.subr.mxu0 0.0
  %480 = vmatpush1.msra.mxu0 0.0
  %481 = vmatprep.subr.mxu0 0.0
  %482 = vmatpush1.msra.mxu0 0.0
  %483 = vmatprep.subr.mxu0 0.0
  %484 = vmatpush1.msra.mxu0 0.0
  %485 = vmatprep.subr.mxu0 0.0
  %486 = vmatpush1.msra.mxu0 0.0
  %487 = vmatprep.subr.mxu0 0.0
  %488 = vmatpush1.msra.mxu0 0.0
  %489 = vmatprep.subr.mxu0 0.0
  %490 = vmatpush1.msra.mxu0 0.0
  %491 = vmatprep.subr.mxu0 0.0
  %492 = vmatpush1.msra.mxu0 0.0
  %493 = vmatprep.subr.mxu0 0.0
  %494 = vmatpush1.msra.mxu0 0.0
  %495 = vmatprep.mubr.f32.mxu0 0.0
  %496 = vmatmul.mubr.f32.gmra.mrb[0].mxu0 %v429
  %v497 = vpop.f32.mrb[0].mxu0
  %v498 = vadd.f32 %v425, %v497
  %v499 = vpop.f32.mrb[0].mxu0
  %v500 = vadd.f32 %v425, %v499
  %501 = vdwg.mxu0
  %502 = vmatprep.subr.mxu0 %v389
  %503 = vmatpush1.msra.mxu0 %v388
  %504 = vmatprep.subr.mxu0 %v393
  %505 = vmatpush1.msra.mxu0 %v392
  %506 = vmatprep.subr.mxu0 %v397
  %507 = vmatpush1.msra.mxu0 %v396
  %508 = vmatprep.subr.mxu0 %v401
  %509 = vmatpush1.msra.mxu0 %v400
  %510 = vmatprep.subr.mxu0 %v405
  %511 = vmatpush1.msra.mxu0 %v404
  %512 = vmatprep.subr.mxu0 %v409
  %513 = vmatpush1.msra.mxu0 %v408
  %514 = vmatprep.subr.mxu0 %v413
  %515 = vmatpush1.msra.mxu0 %v412
  %516 = vmatprep.subr.mxu0 %v417
  %517 = vmatpush1.msra.mxu0 %v416
  %518 = vmatprep.subr.mxu0 %v421
  %519 = vmatpush1.msra.mxu0 %v420
  %520 = vmatprep.subr.mxu0 0.0
  %521 = vmatpush1.msra.mxu0 0.0
  %522 = vmatprep.subr.mxu0 0.0
  %523 = vmatpush1.msra.mxu0 0.0
  %524 = vmatprep.subr.mxu0 0.0
  %525 = vmatpush1.msra.mxu0 0.0
  %526 = vmatprep.subr.mxu0 0.0
  %527 = vmatpush1.msra.mxu0 0.0
  %528 = vmatprep.subr.mxu0 0.0
  %529 = vmatpush1.msra.mxu0 0.0
  %530 = vmatprep.subr.mxu0 0.0
  %531 = vmatpush1.msra.mxu0 0.0
  %532 = vmatprep.subr.mxu0 0.0
  %533 = vmatpush1.msra.mxu0 0.0
  %534 = vmatprep.subr.mxu0 0.0
  %535 = vmatpush1.msra.mxu0 0.0
  %536 = vmatprep.subr.mxu0 0.0
  %537 = vmatpush1.msra.mxu0 0.0
  %538 = vmatprep.subr.mxu0 0.0
  %539 = vmatpush1.msra.mxu0 0.0
  %540 = vmatprep.subr.mxu0 0.0
  %541 = vmatpush1.msra.mxu0 0.0
  %542 = vmatprep.subr.mxu0 0.0
  %543 = vmatpush1.msra.mxu0 0.0
  %544 = vmatprep.subr.mxu0 0.0
  %545 = vmatpush1.msra.mxu0 0.0
  %546 = vmatprep.subr.mxu0 0.0
  %547 = vmatpush1.msra.mxu0 0.0
  %548 = vmatprep.subr.mxu0 0.0
  %549 = vmatpush1.msra.mxu0 0.0
  %550 = vmatprep.subr.mxu0 0.0
  %551 = vmatpush1.msra.mxu0 0.0
  %552 = vmatprep.subr.mxu0 0.0
  %553 = vmatpush1.msra.mxu0 0.0
  %554 = vmatprep.subr.mxu0 0.0
  %555 = vmatpush1.msra.mxu0 0.0
  %556 = vmatprep.subr.mxu0 0.0
  %557 = vmatpush1.msra.mxu0 0.0
  %558 = vmatprep.subr.mxu0 0.0
  %559 = vmatpush1.msra.mxu0 0.0
  %560 = vmatprep.subr.mxu0 0.0
  %561 = vmatpush1.msra.mxu0 0.0
  %562 = vmatprep.subr.mxu0 0.0
  %563 = vmatpush1.msra.mxu0 0.0
  %564 = vmatprep.subr.mxu0 0.0
  %565 = vmatpush1.msra.mxu0 0.0
  %566 = vmatprep.mubr.f32.mxu0 0.0
  %567 = vmatmul.mubr.f32.gmra.mrb[0].mxu0 %v429
  %v568 = vpop.f32.mrb[0].mxu0
  %v569 = vadd.f32 %v425, %v568
  %v570 = vpop.f32.mrb[0].mxu0
  %v571 = vadd.f32 %v425, %v570
  %572 = vdwg.mxu0
  %v573 = vmax.f32 %v498, 0.0
  %v574 = vmax.f32 %v500, 0.0
  %v575 = vmax.f32 %v569, 0.0
  %v576 = vmax.f32 %v571, 0.0
  %v577 = vld [vmem:[%s4] sm:$0xff]
  %v578 = vld [vmem:[%s5] sm:$0xff]
  %579 = vrot.lane.b32.xlu0 %v573, 17
  %v580 = vpop.permute.xlu0 %579
  %581 = vrot.lane.b32.xlu0 %v574, 17
  %v582 = vpop.permute.xlu0 %581
  %583 = vrot.lane.b32.xlu0 %v575, 17
  %v584 = vpop.permute.xlu0 %583
  %585 = vrot.lane.b32.xlu0 %v576, 17
  %v586 = vpop.permute.xlu0 %585
  %v587 = vsel %vm39, %v584, %v586
  %v588 = vsel %vm39, %v582, %v584
  %v589 = vsel %vm39, %v580, %v582
  %v590 = vsel %vm39, %v586, %v580
  %v591 = vld [vmem:[%s1] ss:$8 sm:$0xf]
  %v593 = vlaneseq
  %v594 = vshrl.u32 %v593, 7
  %v595 = vsub.s32 0, %v594
  %v596 = vrot.slane %v591, %v595
  %v597 = vlaneseq
  %v598 = vshrl.u32 %v597, 7
  %v599 = vsub.s32 1, %v598
  %v600 = vrot.slane %v591, %v599
  %v601 = vlaneseq
  %v602 = vshrl.u32 %v601, 7
  %v603 = vsub.s32 2, %v602
  %v604 = vrot.slane %v591, %v603
  %v605 = vlaneseq
  %v606 = vshrl.u32 %v605, 7
  %v607 = vsub.s32 3, %v606
  %v608 = vrot.slane %v591, %v607
  %v613 = vmul.f32 %v590, %v596
  %v614 = vmul.f32 %v589, %v600
  %v615 = vmul.f32 %v588, %v604
  %v616 = vmul.f32 %v587, %v608
  %617 = vst [vmem:[#allocation2] sm:$0xff] %v613
  %618 = vst [vmem:[#allocation2 + $0x8] sm:$0xff] %v614
  %619 = vst [vmem:[#allocation2 + $0x10] sm:$0xff] %v615
  %620 = vst [vmem:[#allocation2 + $0x18] sm:$0xff] %v616
  %621 = vrot.lane.b32.xlu0 %v573, 16
  %v622 = vpop.permute.xlu0 %621
  %623 = vrot.lane.b32.xlu0 %v574, 16
  %v624 = vpop.permute.xlu0 %623
  %625 = vrot.lane.b32.xlu0 %v575, 16
  %v626 = vpop.permute.xlu0 %625
  %627 = vrot.lane.b32.xlu0 %v576, 16
  %v628 = vpop.permute.xlu0 %627
  %v629 = vsel %vm82, %v626, %v628
  %v630 = vsel %vm82, %v624, %v626
  %v631 = vsel %vm82, %v622, %v624
  %v632 = vsel %vm82, %v628, %v622
  %v633 = vld [vmem:[%s87] ss:$8 sm:$0xf]
  %v635 = vlaneseq
  %v636 = vshrl.u32 %v635, 7
  %v637 = vsub.s32 0, %v636
  %v638 = vrot.slane %v633, %v637
  %v639 = vlaneseq
  %v640 = vshrl.u32 %v639, 7
  %v641 = vsub.s32 1, %v640
  %v642 = vrot.slane %v633, %v641
  %v643 = vlaneseq
  %v644 = vshrl.u32 %v643, 7
  %v645 = vsub.s32 2, %v644
  %v646 = vrot.slane %v633, %v645
  %v647 = vlaneseq
  %v648 = vshrl.u32 %v647, 7
  %v649 = vsub.s32 3, %v648
  %v650 = vrot.slane %v633, %v649
  %v655 = vmul.f32 %v632, %v638
  %v656 = vmul.f32 %v631, %v642
  %v657 = vmul.f32 %v630, %v646
  %v658 = vmul.f32 %v629, %v650
  %659 = vst [vmem:[#allocation2 + $0x20] sm:$0xff] %v655
  %660 = vst [vmem:[#allocation2 + $0x28] sm:$0xff] %v656
  %661 = vst [vmem:[#allocation2 + $0x30] sm:$0xff] %v657
  %662 = vst [vmem:[#allocation2 + $0x38] sm:$0xff] %v658
  %663 = vrot.lane.b32.xlu0 %v573, 15
  %v664 = vpop.permute.xlu0 %663
  %665 = vrot.lane.b32.xlu0 %v574, 15
  %v666 = vpop.permute.xlu0 %665
  %667 = vrot.lane.b32.xlu0 %v575, 15
  %v668 = vpop.permute.xlu0 %667
  %669 = vrot.lane.b32.xlu0 %v576, 15
  %v670 = vpop.permute.xlu0 %669
  %v671 = vsel %vm126, %v668, %v670
  %v672 = vsel %vm126, %v666, %v668
  %v673 = vsel %vm126, %v664, %v666
  %v674 = vsel %vm126, %v670, %v664
  %v675 = vld [vmem:[%s131] ss:$8 sm:$0xf]
  %v677 = vlaneseq
  %v678 = vshrl.u32 %v677, 7
  %v679 = vsub.s32 0, %v678
  %v680 = vrot.slane %v675, %v679
  %v681 = vlaneseq
  %v682 = vshrl.u32 %v681, 7
  %v683 = vsub.s32 1, %v682
  %v684 = vrot.slane %v675, %v683
  %v685 = vlaneseq
  %v686 = vshrl.u32 %v685, 7
  %v687 = vsub.s32 2, %v686
  %v688 = vrot.slane %v675, %v687
  %v689 = vlaneseq
  %v690 = vshrl.u32 %v689, 7
  %v691 = vsub.s32 3, %v690
  %v692 = vrot.slane %v675, %v691
  %v697 = vmul.f32 %v674, %v680
  %v698 = vmul.f32 %v673, %v684
  %v699 = vmul.f32 %v672, %v688
  %v700 = vmul.f32 %v671, %v692
  %701 = vst [vmem:[#allocation2 + $0x40] sm:$0xff] %v697
  %702 = vst [vmem:[#allocation2 + $0x48] sm:$0xff] %v698
  %703 = vst [vmem:[#allocation2 + $0x50] sm:$0xff] %v699
  %704 = vst [vmem:[#allocation2 + $0x58] sm:$0xff] %v700
  %705 = vrot.lane.b32.xlu0 %v573, 1
  %v706 = vpop.permute.xlu0 %705
  %707 = vrot.lane.b32.xlu0 %v574, 1
  %v708 = vpop.permute.xlu0 %707
  %709 = vrot.lane.b32.xlu0 %v575, 1
  %v710 = vpop.permute.xlu0 %709
  %711 = vrot.lane.b32.xlu0 %v576, 1
  %v712 = vpop.permute.xlu0 %711
  %v713 = vsel %vm170, %v710, %v712
  %v714 = vsel %vm170, %v708, %v710
  %v715 = vsel %vm170, %v706, %v708
  %v716 = vsel %vm170, %v712, %v706
  %v717 = vld [vmem:[%s175] ss:$8 sm:$0xf]
  %v719 = vlaneseq
  %v720 = vshrl.u32 %v719, 7
  %v721 = vsub.s32 0, %v720
  %v722 = vrot.slane %v717, %v721
  %v723 = vlaneseq
  %v724 = vshrl.u32 %v723, 7
  %v725 = vsub.s32 1, %v724
  %v726 = vrot.slane %v717, %v725
  %v727 = vlaneseq
  %v728 = vshrl.u32 %v727, 7
  %v729 = vsub.s32 2, %v728
  %v730 = vrot.slane %v717, %v729
  %v731 = vlaneseq
  %v732 = vshrl.u32 %v731, 7
  %v733 = vsub.s32 3, %v732
  %v734 = vrot.slane %v717, %v733
  %v739 = vmul.f32 %v716, %v722
  %v740 = vmul.f32 %v715, %v726
  %v741 = vmul.f32 %v714, %v730
  %v742 = vmul.f32 %v713, %v734
  %743 = vst [vmem:[#allocation2 + $0x60] sm:$0xff] %v739
  %744 = vst [vmem:[#allocation2 + $0x68] sm:$0xff] %v740
  %745 = vst [vmem:[#allocation2 + $0x70] sm:$0xff] %v741
  %746 = vst [vmem:[#allocation2 + $0x78] sm:$0xff] %v742
  %747 = vst [vmem:[#allocation2 + $0x80] sm:$0xff] %v573
  %748 = vst [vmem:[#allocation2 + $0x88] sm:$0xff] %v574
  %749 = vst [vmem:[#allocation2 + $0x90] sm:$0xff] %v575
  %750 = vst [vmem:[#allocation2 + $0x98] sm:$0xff] %v576
  %751 = vrot.lane.b32.xlu0 %v573, 127
  %v752 = vpop.permute.xlu0 %751
  %753 = vrot.lane.b32.xlu0 %v574, 127
  %v754 = vpop.permute.xlu0 %753
  %755 = vrot.lane.b32.xlu0 %v575, 127
  %v756 = vpop.permute.xlu0 %755
  %757 = vrot.lane.b32.xlu0 %v576, 127
  %v758 = vpop.permute.xlu0 %757
  %v759 = vsel %vm218, %v756, %v758
  %v760 = vsel %vm218, %v754, %v756
  %v761 = vsel %vm218, %v752, %v754
  %v762 = vsel %vm218, %v758, %v752
  %v763 = vld [vmem:[%s223] ss:$8 sm:$0xf]
  %v765 = vlaneseq
  %v766 = vshrl.u32 %v765, 7
  %v767 = vsub.s32 0, %v766
  %v768 = vrot.slane %v763, %v767
  %v769 = vlaneseq
  %v770 = vshrl.u32 %v769, 7
  %v771 = vsub.s32 1, %v770
  %v772 = vrot.slane %v763, %v771
  %v773 = vlaneseq
  %v774 = vshrl.u32 %v773, 7
  %v775 = vsub.s32 2, %v774
  %v776 = vrot.slane %v763, %v775
  %v777 = vlaneseq
  %v778 = vshrl.u32 %v777, 7
  %v779 = vsub.s32 3, %v778
  %v780 = vrot.slane %v763, %v779
  %v785 = vmul.f32 %v761, %v768
  %v786 = vmul.f32 %v760, %v772
  %v787 = vmul.f32 %v759, %v776
  %v788 = vmul.f32 %v762, %v780
  %789 = vst [vmem:[#allocation2 + $0xa0] sm:$0xff] %v785
  %790 = vst [vmem:[#allocation2 + $0xa8] sm:$0xff] %v786
  %791 = vst [vmem:[#allocation2 + $0xb0] sm:$0xff] %v787
  %792 = vst [vmem:[#allocation2 + $0xb8] sm:$0xff] %v788
  %793 = vrot.lane.b32.xlu0 %v573, 113
  %v794 = vpop.permute.xlu0 %793
  %795 = vrot.lane.b32.xlu0 %v574, 113
  %v796 = vpop.permute.xlu0 %795
  %797 = vrot.lane.b32.xlu0 %v575, 113
  %v798 = vpop.permute.xlu0 %797
  %799 = vrot.lane.b32.xlu0 %v576, 113
  %v800 = vpop.permute.xlu0 %799
  %v801 = vsel %vm262, %v798, %v800
  %v802 = vsel %vm262, %v796, %v798
  %v803 = vsel %vm262, %v794, %v796
  %v804 = vsel %vm262, %v800, %v794
  %v805 = vld [vmem:[%s267] ss:$8 sm:$0xf]
  %v807 = vlaneseq
  %v808 = vshrl.u32 %v807, 7
  %v809 = vsub.s32 0, %v808
  %v810 = vrot.slane %v805, %v809
  %v811 = vlaneseq
  %v812 = vshrl.u32 %v811, 7
  %v813 = vsub.s32 1, %v812
  %v814 = vrot.slane %v805, %v813
  %v815 = vlaneseq
  %v816 = vshrl.u32 %v815, 7
  %v817 = vsub.s32 2, %v816
  %v818 = vrot.slane %v805, %v817
  %v819 = vlaneseq
  %v820 = vshrl.u32 %v819, 7
  %v821 = vsub.s32 3, %v820
  %v822 = vrot.slane %v805, %v821
  %v827 = vmul.f32 %v803, %v810
  %v828 = vmul.f32 %v802, %v814
  %v829 = vmul.f32 %v801, %v818
  %v830 = vmul.f32 %v804, %v822
  %831 = vst [vmem:[#allocation2 + $0xc0] sm:$0xff] %v827
  %832 = vst [vmem:[#allocation2 + $0xc8] sm:$0xff] %v828
  %833 = vst [vmem:[#allocation2 + $0xd0] sm:$0xff] %v829
  %834 = vst [vmem:[#allocation2 + $0xd8] sm:$0xff] %v830
  %835 = vrot.lane.b32.xlu0 %v573, 112
  %v836 = vpop.permute.xlu0 %835
  %837 = vrot.lane.b32.xlu0 %v574, 112
  %v838 = vpop.permute.xlu0 %837
  %839 = vrot.lane.b32.xlu0 %v575, 112
  %v840 = vpop.permute.xlu0 %839
  %841 = vrot.lane.b32.xlu0 %v576, 112
  %v842 = vpop.permute.xlu0 %841
  %v843 = vsel %vm306, %v840, %v842
  %v844 = vsel %vm306, %v838, %v840
  %v845 = vsel %vm306, %v836, %v838
  %v846 = vsel %vm306, %v842, %v836
  %v847 = vld [vmem:[%s311] ss:$8 sm:$0xf]
  %v849 = vlaneseq
  %v850 = vshrl.u32 %v849, 7
  %v851 = vsub.s32 0, %v850
  %v852 = vrot.slane %v847, %v851
  %v853 = vlaneseq
  %v854 = vshrl.u32 %v853, 7
  %v855 = vsub.s32 1, %v854
  %v856 = vrot.slane %v847, %v855
  %v857 = vlaneseq
  %v858 = vshrl.u32 %v857, 7
  %v859 = vsub.s32 2, %v858
  %v860 = vrot.slane %v847, %v859
  %v861 = vlaneseq
  %v862 = vshrl.u32 %v861, 7
  %v863 = vsub.s32 3, %v862
  %v864 = vrot.slane %v847, %v863
  %v869 = vmul.f32 %v845, %v852
  %v870 = vmul.f32 %v844, %v856
  %v871 = vmul.f32 %v843, %v860
  %v872 = vmul.f32 %v846, %v864
  %873 = vst [vmem:[#allocation2 + $0xe0] sm:$0xff] %v869
  %874 = vst [vmem:[#allocation2 + $0xe8] sm:$0xff] %v870
  %875 = vst [vmem:[#allocation2 + $0xf0] sm:$0xff] %v871
  %876 = vst [vmem:[#allocation2 + $0xf8] sm:$0xff] %v872
  %877 = vrot.lane.b32.xlu0 %v573, 111
  %v878 = vpop.permute.xlu0 %877
  %879 = vrot.lane.b32.xlu0 %v574, 111
  %v880 = vpop.permute.xlu0 %879
  %881 = vrot.lane.b32.xlu0 %v575, 111
  %v882 = vpop.permute.xlu0 %881
  %883 = vrot.lane.b32.xlu0 %v576, 111
  %v884 = vpop.permute.xlu0 %883
  %v885 = vsel %vm350, %v882, %v884
  %v886 = vsel %vm350, %v880, %v882
  %v887 = vsel %vm350, %v878, %v880
  %v888 = vsel %vm350, %v884, %v878
  %v889 = vld [vmem:[%s355] ss:$8 sm:$0xf]
  %v891 = vlaneseq
  %v892 = vshrl.u32 %v891, 7
  %v893 = vsub.s32 0, %v892
  %v894 = vrot.slane %v889, %v893
  %v895 = vlaneseq
  %v896 = vshrl.u32 %v895, 7
  %v897 = vsub.s32 1, %v896
  %v898 = vrot.slane %v889, %v897
  %v899 = vlaneseq
  %v900 = vshrl.u32 %v899, 7
  %v901 = vsub.s32 2, %v900
  %v902 = vrot.slane %v889, %v901
  %v903 = vlaneseq
  %v904 = vshrl.u32 %v903, 7
  %v905 = vsub.s32 3, %v904
  %v906 = vrot.slane %v889, %v905
  %v911 = vmul.f32 %v887, %v894
  %v912 = vmul.f32 %v886, %v898
  %v913 = vmul.f32 %v885, %v902
  %v914 = vmul.f32 %v888, %v906
  %915 = vst [vmem:[#allocation2 + $0x100] sm:$0xff] %v911
  %916 = vst [vmem:[#allocation2 + $0x108] sm:$0xff] %v912
  %917 = vst [vmem:[#allocation2 + $0x110] sm:$0xff] %v913
  %918 = vst [vmem:[#allocation2 + $0x118] sm:$0xff] %v914
  %v919 = vld [vmem:[#allocation2] sm:$0xff]
  %v920 = vld [vmem:[#allocation2 + $0x8] sm:$0xff]
  %v921 = vld [vmem:[#allocation2 + $0x10] sm:$0xff]
  %v922 = vld [vmem:[#allocation2 + $0x18] sm:$0xff]
  %v923 = vld [vmem:[#allocation2 + $0x20] sm:$0xff]
  %v924 = vld [vmem:[#allocation2 + $0x28] sm:$0xff]
  %v925 = vld [vmem:[#allocation2 + $0x30] sm:$0xff]
  %v926 = vld [vmem:[#allocation2 + $0x38] sm:$0xff]
  %v927 = vld [vmem:[#allocation2 + $0x40] sm:$0xff]
  %v928 = vld [vmem:[#allocation2 + $0x48] sm:$0xff]
  %v929 = vld [vmem:[#allocation2 + $0x50] sm:$0xff]
  %v930 = vld [vmem:[#allocation2 + $0x58] sm:$0xff]
  %v931 = vld [vmem:[#allocation2 + $0x60] sm:$0xff]
  %v932 = vld [vmem:[#allocation2 + $0x68] sm:$0xff]
  %v933 = vld [vmem:[#allocation2 + $0x70] sm:$0xff]
  %v934 = vld [vmem:[#allocation2 + $0x78] sm:$0xff]
  %v935 = vld [vmem:[#allocation2 + $0x80] sm:$0xff]
  %v936 = vld [vmem:[#allocation2 + $0x88] sm:$0xff]
  %v937 = vld [vmem:[#allocation2 + $0x90] sm:$0xff]
  %v938 = vld [vmem:[#allocation2 + $0x98] sm:$0xff]
  %v939 = vld [vmem:[#allocation2 + $0xa0] sm:$0xff]
  %v940 = vld [vmem:[#allocation2 + $0xa8] sm:$0xff]
  %v941 = vld [vmem:[#allocation2 + $0xb0] sm:$0xff]
  %v942 = vld [vmem:[#allocation2 + $0xb8] sm:$0xff]
  %v943 = vld [vmem:[#allocation2 + $0xc0] sm:$0xff]
  %v944 = vld [vmem:[#allocation2 + $0xc8] sm:$0xff]
  %v945 = vld [vmem:[#allocation2 + $0xd0] sm:$0xff]
  %v946 = vld [vmem:[#allocation2 + $0xd8] sm:$0xff]
  %v947 = vld [vmem:[#allocation2 + $0xe0] sm:$0xff]
  %v948 = vld [vmem:[#allocation2 + $0xe8] sm:$0xff]
  %v949 = vld [vmem:[#allocation2 + $0xf0] sm:$0xff]
  %v950 = vld [vmem:[#allocation2 + $0xf8] sm:$0xff]
  %v951 = vld [vmem:[#allocation2 + $0x100] sm:$0xff]
  %v952 = vld [vmem:[#allocation2 + $0x108] sm:$0xff]
  %v953 = vld [vmem:[#allocation2 + $0x110] sm:$0xff]
  %v954 = vld [vmem:[#allocation2 + $0x118] sm:$0xff]
  %956 = vset.pattern.permute.xlu0 0
  %957 = vperm.xlu0 %956, %v578
  %v958 = vpop.permute.xlu0 %957
  %v961 = vsel %vm427, %v577, 0
  %963 = vmatprep.subr.mxu0 %v920
  %964 = vmatpush1.msra.mxu0 %v919
  %965 = vmatprep.subr.mxu0 %v924
  %966 = vmatpush1.msra.mxu0 %v923
  %967 = vmatprep.subr.mxu0 %v928
  %968 = vmatpush1.msra.mxu0 %v927
  %969 = vmatprep.subr.mxu0 %v932
  %970 = vmatpush1.msra.mxu0 %v931
  %971 = vmatprep.subr.mxu0 %v936
  %972 = vmatpush1.msra.mxu0 %v935
  %973 = vmatprep.subr.mxu0 %v940
  %974 = vmatpush1.msra.mxu0 %v939
  %975 = vmatprep.subr.mxu0 %v944
  %976 = vmatpush1.msra.mxu0 %v943
  %977 = vmatprep.subr.mxu0 %v948
  %978 = vmatpush1.msra.mxu0 %v947
  %979 = vmatprep.subr.mxu0 %v952
  %980 = vmatpush1.msra.mxu0 %v951
  %981 = vmatprep.subr.mxu0 0.0
  %982 = vmatpush1.msra.mxu0 0.0
  %983 = vmatprep.subr.mxu0 0.0
  %984 = vmatpush1.msra.mxu0 0.0
  %985 = vmatprep.subr.mxu0 0.0
  %986 = vmatpush1.msra.mxu0 0.0
  %987 = vmatprep.subr.mxu0 0.0
  %988 = vmatpush1.msra.mxu0 0.0
  %989 = vmatprep.subr.mxu0 0.0
  %990 = vmatpush1.msra.mxu0 0.0
  %991 = vmatprep.subr.mxu0 0.0
  %992 = vmatpush1.msra.mxu0 0.0
  %993 = vmatprep.subr.mxu0 0.0
  %994 = vmatpush1.msra.mxu0 0.0
  %995 = vmatprep.subr.mxu0 0.0
  %996 = vmatpush1.msra.mxu0 0.0
  %997 = vmatprep.subr.mxu0 0.0
  %998 = vmatpush1.msra.mxu0 0.0
  %999 = vmatprep.subr.mxu0 0.0
  %1000 = vmatpush1.msra.mxu0 0.0
  %1001 = vmatprep.subr.mxu0 0.0
  %1002 = vmatpush1.msra.mxu0 0.0
  %1003 = vmatprep.subr.mxu0 0.0
  %1004 = vmatpush1.msra.mxu0 0.0
  %1005 = vmatprep.subr.mxu0 0.0
  %1006 = vmatpush1.msra.mxu0 0.0
  %1007 = vmatprep.subr.mxu0 0.0
  %1008 = vmatpush1.msra.mxu0 0.0
  %1009 = vmatprep.subr.mxu0 0.0
  %1010 = vmatpush1.msra.mxu0 0.0
  %1011 = vmatprep.subr.mxu0 0.0
  %1012 = vmatpush1.msra.mxu0 0.0
  %1013 = vmatprep.subr.mxu0 0.0
  %1014 = vmatpush1.msra.mxu0 0.0
  %1015 = vmatprep.subr.mxu0 0.0
  %1016 = vmatpush1.msra.mxu0 0.0
  %1017 = vmatprep.subr.mxu0 0.0
  %1018 = vmatpush1.msra.mxu0 0.0
  %1019 = vmatprep.subr.mxu0 0.0
  %1020 = vmatpush1.msra.mxu0 0.0
  %1021 = vmatprep.subr.mxu0 0.0
  %1022 = vmatpush1.msra.mxu0 0.0
  %1023 = vmatprep.subr.mxu0 0.0
  %1024 = vmatpush1.msra.mxu0 0.0
  %1025 = vmatprep.subr.mxu0 0.0
  %1026 = vmatpush1.msra.mxu0 0.0
  %1027 = vmatprep.mubr.f32.mxu0 0.0
  %1028 = vmatmul.mubr.f32.gmra.mrb[0].mxu0 %v961
  %v1029 = vpop.f32.mrb[0].mxu0
  %v1030 = vadd.f32 %v958, %v1029
  %v1031 = vpop.f32.mrb[0].mxu0
  %v1032 = vadd.f32 %v958, %v1031
  %1033 = vdwg.mxu0
  %1034 = vmatprep.subr.mxu0 %v922
  %1035 = vmatpush1.msra.mxu0 %v921
  %1036 = vmatprep.subr.mxu0 %v926
  %1037 = vmatpush1.msra.mxu0 %v925
  %1038 = vmatprep.subr.mxu0 %v930
  %1039 = vmatpush1.msra.mxu0 %v929
  %1040 = vmatprep.subr.mxu0 %v934
  %1041 = vmatpush1.msra.mxu0 %v933
  %1042 = vmatprep.subr.mxu0 %v938
  %1043 = vmatpush1.msra.mxu0 %v937
  %1044 = vmatprep.subr.mxu0 %v942
  %1045 = vmatpush1.msra.mxu0 %v941
  %1046 = vmatprep.subr.mxu0 %v946
  %1047 = vmatpush1.msra.mxu0 %v945
  %1048 = vmatprep.subr.mxu0 %v950
  %1049 = vmatpush1.msra.mxu0 %v949
  %1050 = vmatprep.subr.mxu0 %v954
  %1051 = vmatpush1.msra.mxu0 %v953
  %1052 = vmatprep.subr.mxu0 0.0
  %1053 = vmatpush1.msra.mxu0 0.0
  %1054 = vmatprep.subr.mxu0 0.0
  %1055 = vmatpush1.msra.mxu0 0.0
  %1056 = vmatprep.subr.mxu0 0.0
  %1057 = vmatpush1.msra.mxu0 0.0
  %1058 = vmatprep.subr.mxu0 0.0
  %1059 = vmatpush1.msra.mxu0 0.0
  %1060 = vmatprep.subr.mxu0 0.0
  %1061 = vmatpush1.msra.mxu0 0.0
  %1062 = vmatprep.subr.mxu0 0.0
  %1063 = vmatpush1.msra.mxu0 0.0
  %1064 = vmatprep.subr.mxu0 0.0
  %1065 = vmatpush1.msra.mxu0 0.0
  %1066 = vmatprep.subr.mxu0 0.0
  %1067 = vmatpush1.msra.mxu0 0.0
  %1068 = vmatprep.subr.mxu0 0.0
  %1069 = vmatpush1.msra.mxu0 0.0
  %1070 = vmatprep.subr.mxu0 0.0
  %1071 = vmatpush1.msra.mxu0 0.0
  %1072 = vmatprep.subr.mxu0 0.0
  %1073 = vmatpush1.msra.mxu0 0.0
  %1074 = vmatprep.subr.mxu0 0.0
  %1075 = vmatpush1.msra.mxu0 0.0
  %1076 = vmatprep.subr.mxu0 0.0
  %1077 = vmatpush1.msra.mxu0 0.0
  %1078 = vmatprep.subr.mxu0 0.0
  %1079 = vmatpush1.msra.mxu0 0.0
  %1080 = vmatprep.subr.mxu0 0.0
  %1081 = vmatpush1.msra.mxu0 0.0
  %1082 = vmatprep.subr.mxu0 0.0
  %1083 = vmatpush1.msra.mxu0 0.0
  %1084 = vmatprep.subr.mxu0 0.0
  %1085 = vmatpush1.msra.mxu0 0.0
  %1086 = vmatprep.subr.mxu0 0.0
  %1087 = vmatpush1.msra.mxu0 0.0
  %1088 = vmatprep.subr.mxu0 0.0
  %1089 = vmatpush1.msra.mxu0 0.0
  %1090 = vmatprep.subr.mxu0 0.0
  %1091 = vmatpush1.msra.mxu0 0.0
  %1092 = vmatprep.subr.mxu0 0.0
  %1093 = vmatpush1.msra.mxu0 0.0
  %1094 = vmatprep.subr.mxu0 0.0
  %1095 = vmatpush1.msra.mxu0 0.0
  %1096 = vmatprep.subr.mxu0 0.0
  %1097 = vmatpush1.msra.mxu0 0.0
  %1098 = vmatprep.mubr.f32.mxu0 0.0
  %1099 = vmatmul.mubr.f32.gmra.mrb[0].mxu0 %v961
  %v1100 = vpop.f32.mrb[0].mxu0
  %v1101 = vadd.f32 %v958, %v1100
  %v1102 = vpop.f32.mrb[0].mxu0
  %v1103 = vadd.f32 %v958, %v1102
  %1104 = vdwg.mxu0
  %v1105 = vmax.f32 %v1030, 0.0
  %v1106 = vmax.f32 %v1032, 0.0
  %v1107 = vmax.f32 %v1101, 0.0
  %v1108 = vmax.f32 %v1103, 0.0
  %1109 = vst [vmem:[%s6] sm:$0xff] %v1105
  %1110 = vst [vmem:[%s6 + $0x8] sm:$0xff] %v1106
  %1111 = vst [vmem:[%s6 + $0x10] sm:$0xff] %v1107
  %1112 = vst [vmem:[%s6 + $0x18] sm:$0xff] %v1108
  // Predicated region
  $region26: #{dimensional_reduction.1} parent=0 // pred_check
    _
  $region27: #{dimensional_reduction.1} parent=0 // pred_check_branch
    %1114 = sbr.rel (0) target = $region29
  $region28: #{dimensional_reduction.1} parent=0 // pred_region
    _
  $region29: #{dimensional_reduction.1} parent=0 // pred_fallthru
    _
  // Predicated region
  $region30: #{dimensional_reduction.1} parent=0 // pred_check
    _
  $region31: #{dimensional_reduction.1} parent=0 // pred_check_branch
    %1116 = sbr.rel (0) target = $region33
  $region32: #{dimensional_reduction.1} parent=0 // pred_region
    _
  $region33: #{dimensional_reduction.1} parent=0 // pred_fallthru
    _

</llo_original>
